<compile_context>
chip_gen: v6e
topology: v6e:2x2x1
jax: 0.10.0
libtpu: 0.0.40
codegen_flags: <defaults>
</compile_context>

<pallas_src>
import functools

import jax
import jax.numpy as jnp
from jax.experimental import pallas as pl
from jax.experimental.pallas import tpu as pltpu

_LANES = 128
_TILE_BYTES_PER_INPUT = 2 * 1024 * 1024    # -> 4096 rows f32, 8192 rows bf16
_VMEM_LIMIT_BYTES = 32 * 1024 * 1024       # lifts v5e's 16 MiB scoped default


def _round_up(n, m):
    return ((n + m - 1) // m) * m


def _sublane_align(dtype):
    return {4: 8, 2: 16, 1: 32}.get(jnp.dtype(dtype).itemsize, 8)


@functools.lru_cache(maxsize=None)
def _has_bf16_valu():
    """v6e/v7x VALUs are bf16-native; v4/v5 are not (upcast first there)."""
    try:
        kind = jax.devices()[0].device_kind.lower()
    except Exception:
        return True
    return not ("v4" in kind or "v5" in kind)


def _lane_split(arr):
    """Lane-dense (rows, 128) view of the flat prefix + tiny (<128) flat tail.

    Pure reshape/slice: no padded HBM copy of the input is materialized.
    """
    flat = arr.reshape(-1)
    n = flat.shape[0]
    main_n = (n // _LANES) * _LANES
    main = flat[:main_n].reshape(main_n // _LANES, _LANES)
    tail = flat[main_n:]
    return main, tail


def _mse_sum_kernel(x_ref, t_ref, out_ref, acc_ref, *, tile_rows, rows,
                    nblocks, num_cores, blocks_per_core, need_mask,
                    has_phantom, sub_in_native):
    c = pl.program_id(0)                 # TensorCore shard (core-parallel)
    i = pl.program_id(1)                 # reduction step (arbitrary)
    gb = i * num_cores + c               # round-robin global block id

    @pl.when(i == 0)
    def _():
        acc_ref[...] = jnp.zeros_like(acc_ref)

    x = x_ref[...]
    t = t_ref[...]
    if sub_in_native and jnp.dtype(x_ref.dtype) != jnp.dtype(jnp.float32):
        # bf16-native VALUs (v6e/v7x): one cast per element instead of two.
        d = (x - t).astype(jnp.float32)
    else:
        d = x.astype(jnp.float32) - t.astype(jnp.float32)
    d2 = d * d

    def accumulate(vals):
        # Fold into the (8, 128) vreg accumulator: pure VPU adds, no XLU/SMEM
        # work in the steady state.
        acc_ref[...] += vals.reshape(tile_rows // 8, 8, _LANES).sum(axis=0)

    if need_mask:
        is_partial = gb == nblocks - 1
        plain = jnp.logical_not(is_partial)
        if has_phantom:
            plain = jnp.logical_and(plain, gb < nblocks)

        @pl.when(plain)                  # steady state: no mask work at all
        def _():
            accumulate(d2)

        @pl.when(is_partial)             # only the single partial block
        def _():
            start = (nblocks - 1) * tile_rows
            row_ids = jax.lax.broadcasted_iota(jnp.int32, d2.shape, 0)
            accumulate(jnp.where(row_ids + start < rows, d2, 0.0))
    else:
        if has_phantom:
            @pl.when(gb < nblocks)       # skip the phantom block entirely
            def _():
                accumulate(d2)
        else:
            accumulate(d2)

    @pl.when(i == blocks_per_core - 1)
    def _():
        out_ref[0, 0] = jnp.sum(acc_ref[...])   # single cross-lane reduce


_SEM_CACHE = {}   # num_cores -> index into _dim_semantics_candidates()


def _dim_semantics_candidates():
    cands = []
    core_par = getattr(pltpu, "CORE_PARALLEL", None)
    arb = getattr(pltpu, "ARBITRARY", "arbitrary")
    if core_par is not None:
        cands.append((core_par, arb))            # real 2-TC split on v7x
    cands.append(("parallel", "arbitrary"))      # portable fallback
    return cands


def _mse_sum_pallas(x2, t2, *, max_tile_rows=None):
    """Sum of squared differences over a lane-dense (rows, 128) slab."""
    rows, lanes = x2.shape
    assert lanes == _LANES and t2.shape == x2.shape

    itemsize = jnp.dtype(x2.dtype).itemsize
    tile_cap = _TILE_BYTES_PER_INPUT // (_LANES * itemsize)
    if max_tile_rows is not None:
        tile_cap = min(tile_cap, max_tile_rows)
    tile_cap = max(8, _round_up(tile_cap, 8))
    tile_rows = min(tile_cap, _round_up(rows, _sublane_align(x2.dtype)))

    nblocks = -(-rows // tile_rows)
    need_mask = (rows % tile_rows) != 0

    # Shard the reduction across both TensorCores with round-robin block
    # assignment.  Odd block counts get a phantom final block on one core
    # (skipped in-kernel) instead of dropping the split.
    num_cores = 2 if nblocks >= 2 else 1
    blocks_per_core = -(-nblocks // num_cores)
    has_phantom = blocks_per_core * num_cores != nblocks

    kernel = functools.partial(
        _mse_sum_kernel,
        tile_rows=tile_rows, rows=rows, nblocks=nblocks, num_cores=num_cores,
        blocks_per_core=blocks_per_core, need_mask=need_mask,
        has_phantom=has_phantom, sub_in_native=_has_bf16_valu())

    if has_phantom:
        def in_map(c, i):
            # Clamp the phantom block's DMA onto the last real block; the
            # kernel skips accumulating it.
            return (jnp.minimum(i * num_cores + c, nblocks - 1), 0)
    else:
        def in_map(c, i):
            return (i * num_cores + c, 0)

    n_elems = rows * _LANES
    cost = pl.CostEstimate(flops=3 * n_elems, transcendentals=0,
                           bytes_accessed=2 * n_elems * itemsize + 4 * num_cores)

    def build(dim_sems):
        return pl.pallas_call(
            kernel,
            out_shape=jax.ShapeDtypeStruct((num_cores, 1), jnp.float32),
            grid_spec=pltpu.PrefetchScalarGridSpec(
                num_scalar_prefetch=0,
                grid=(num_cores, blocks_per_core),
                in_specs=[pl.BlockSpec((tile_rows, _LANES), in_map),
                          pl.BlockSpec((tile_rows, _LANES), in_map)],
                out_specs=pl.BlockSpec((1, 1), lambda c, i: (c, 0),
                                       memory_space=pltpu.SMEM),
                scratch_shapes=[pltpu.VMEM((8, _LANES), jnp.float32)]),
            compiler_params=pltpu.CompilerParams(
                dimension_semantics=dim_sems,
                vmem_limit_bytes=_VMEM_LIMIT_BYTES),
            cost_estimate=cost,
        )(x2, t2)

    cands = _dim_semantics_candidates()
    cached = _SEM_CACHE.get(num_cores)
    if cached is not None:
        partials = build(cands[cached])
    else:
        err = None
        partials = None
        for idx, sems in enumerate(cands):
            try:
                partials = jax.block_until_ready(build(sems))
                _SEM_CACHE[num_cores] = idx
                err = None
                break
            except Exception as e:   # e.g. CORE_PARALLEL rejected on this chip
                err = e
        if err is not None:
            raise err

    return jnp.sum(partials)


class ContentLoss:
    """JAX/Pallas port of the PyTorch ContentLoss module.

    __call__(x) computes self.loss = mean((x - target)^2) with a Pallas TPU
    kernel and returns x unchanged (pass-through).
    """

    def __init__(self, target, *, _max_tile_rows=None):
        # target.detach() -> hold the value, no gradient flow.
        self.target = jax.lax.stop_gradient(target)
        # Hoist the constant target view out of the per-call hot path.
        self._t_main, self._t_tail = _lane_split(self.target)
        self._max_tile_rows = _max_tile_rows
        self.loss = None

    def __call__(self, content_input):
        assert content_input.shape == self.target.shape
        x_main, x_tail = _lane_split(content_input)

        if x_main.shape[0] > 0:
            sse = _mse_sum_pallas(x_main, self._t_main,
                                  max_tile_rows=self._max_tile_rows)
        else:
            sse = jnp.float32(0.0)
        if x_tail.shape[0] > 0:
            dt = x_tail.astype(jnp.float32) - self._t_tail.astype(jnp.float32)
            sse = sse + jnp.sum(dt * dt)

        self.loss = sse / jnp.float32(content_input.size)
        return content_input  # pass-through, exactly like the PyTorch module

    forward = __call__

    # callback() in PyTorch runs loss.backward(retain_graph=True); in JAX
    # gradients are taken functionally by the caller (jax.grad over the loss).
    # TODO(synk): no stateful in-module backward() equivalent in functional JAX.


def _check(shape, key, dtype=jnp.float32, rtol=1e-4, atol=1e-6,
           max_tile_rows=None):
    k1, k2 = jax.random.split(key)
    x = jax.random.normal(k1, shape, dtype=jnp.float32).astype(dtype)
    t = jax.random.normal(k2, shape, dtype=jnp.float32).astype(dtype)
    module = ContentLoss(t, _max_tile_rows=max_tile_rows)
    out = module(x)
    loss = jax.block_until_ready(module.loss)
    ref = jnp.mean((x.astype(jnp.float32) - t.astype(jnp.float32)) ** 2)
    assert jnp.allclose(loss, ref, rtol=rtol, atol=atol), (shape, dtype, loss, ref)
    assert out is x  # exact pass-through


if __name__ == "__main__":
    key = jax.random.PRNGKey(0)
    ks = jax.random.split(key, 5)

    # Primary case: NCHW batch=2, channels=4, spatial=16x16 (single block).
    _check((2, 4, 16, 16), ks[0])
    # Multi-block, even round-robin 2-core split (small tile override).
    _check((4, 128, 32, 32), ks[1], max_tile_rows=512)
    # Odd block count (phantom block on one core) + partial-last-block mask
    # + <128-element flat tail handled in the wrapper.
    _check((2, 3, 123, 190), ks[2], max_tile_rows=256)
    # bf16 inputs: native-dtype DMA, subtract-then-upcast on bf16 VALUs.
    _check((2, 4, 16, 16), ks[3], dtype=jnp.bfloat16, rtol=2e-2, atol=1e-3)
    # Default (large, 4096-row) tiles with a partial last block + phantom.
    _check((5, 256, 32, 32), ks[4])

    print("KERNEL_OK")
</pallas_src>

<mosaic_0001>
module attributes {stable_mosaic.version = 11 : i64} {
  func.func @_mse_sum_kernel(%arg0: i32, %arg1: i32, %arg2: memref<16x128xf32, #tpu.memory_space<vmem>>, %arg3: memref<16x128xf32, #tpu.memory_space<vmem>>, %arg4: memref<1x1xf32, #tpu.memory_space<smem>>, %arg5: memref<8x128xf32, #tpu.memory_space<vmem>>) attributes {dimension_semantics = [#tpu.dimension_semantics<core_parallel>, #tpu.dimension_semantics<arbitrary>], iteration_bounds = array<i64: 1, 1>, scalar_prefetch = 0 : i64, scratch_operands = 1 : i64, tpu.core_type = #tpu.core_type<tc>, window_params = [{transform_indices = @transform_0, window_bounds = array<i64: 16, 128>}, {transform_indices = @transform_1, window_bounds = array<i64: 16, 128>}, {transform_indices = @transform_2, window_bounds = array<i64: 1, 1>}]} {
    %c0_i32 = arith.constant 0 : i32
    %0 = arith.cmpi eq, %arg1, %c0_i32 : i32
    %1 = arith.extui %0 : i1 to i32
    %c0_i32_0 = arith.constant 0 : i32
    %2 = arith.cmpi ne, %1, %c0_i32_0 : i32
    scf.if %2 {
      %cst_10 = arith.constant 0.000000e+00 : f32
      %15 = vector.broadcast %cst_10 : f32 to vector<8x128xf32>
      %c0_11 = arith.constant 0 : index
      %c0_12 = arith.constant 0 : index
      %16 = vector.load %arg5[%c0_11, %c0_12] : memref<8x128xf32, #tpu.memory_space<vmem>>, vector<8x128xf32>
      tpu.vector_store %arg5[%c0_11, %c0_12], %15 {strides = array<i32>} : memref<8x128xf32, #tpu.memory_space<vmem>>, vector<8x128xf32>,
    } else {
    }
    %c0 = arith.constant 0 : index
    %c0_1 = arith.constant 0 : index
    %3 = vector.load %arg2[%c0, %c0_1] : memref<16x128xf32, #tpu.memory_space<vmem>>, vector<16x128xf32>
    %c0_2 = arith.constant 0 : index
    %c0_3 = arith.constant 0 : index
    %4 = vector.load %arg3[%c0_2, %c0_3] : memref<16x128xf32, #tpu.memory_space<vmem>>, vector<16x128xf32>
    %5 = arith.subf %3, %4 : vector<16x128xf32>
    %6 = arith.mulf %5, %5 : vector<16x128xf32>
    %c0_4 = arith.constant 0 : index
    %c0_5 = arith.constant 0 : index
    %7 = vector.load %arg5[%c0_4, %c0_5] : memref<8x128xf32, #tpu.memory_space<vmem>>, vector<8x128xf32>
    %8 = vector.shape_cast %6 : vector<16x128xf32> to vector<2x8x128xf32>
    %cst = arith.constant dense<0.000000e+00> : vector<8x128xf32>
    %9 = vector.multi_reduction <add>, %8, %cst [0] : vector<2x8x128xf32> to vector<8x128xf32>
    %10 = arith.addf %7, %9 : vector<8x128xf32>
    %c0_6 = arith.constant 0 : index
    %c0_7 = arith.constant 0 : index
    %11 = vector.load %arg5[%c0_6, %c0_7] : memref<8x128xf32, #tpu.memory_space<vmem>>, vector<8x128xf32>
    tpu.vector_store %arg5[%c0_6, %c0_7], %10 {strides = array<i32>} : memref<8x128xf32, #tpu.memory_space<vmem>>, vector<8x128xf32>,
    %c0_i32_8 = arith.constant 0 : i32
    %12 = arith.cmpi eq, %arg1, %c0_i32_8 : i32
    %13 = arith.extui %12 : i1 to i32
    %c0_i32_9 = arith.constant 0 : i32
    %14 = arith.cmpi ne, %13, %c0_i32_9 : i32
    scf.if %14 {
      %c0_10 = arith.constant 0 : index
      %c0_11 = arith.constant 0 : index
      %15 = vector.load %arg5[%c0_10, %c0_11] : memref<8x128xf32, #tpu.memory_space<vmem>>, vector<8x128xf32>
      %16 = vector.shape_cast %15 : vector<8x128xf32> to vector<1x8x128xf32>
      %cst_12 = arith.constant dense<0.000000e+00> : vector<1xf32>
      %17 = vector.multi_reduction <add>, %16, %cst_12 [1, 2] : vector<1x8x128xf32> to vector<1xf32>
      %18 = vector.shape_cast %17 : vector<1xf32> to vector<1x1x1xf32>
      %19 = vector.extract %18[0, 0, 0] : f32 from vector<1x1x1xf32>
      %c0_13 = arith.constant 0 : index
      %c0_14 = arith.constant 0 : index
      %20 = memref.load %arg4[%c0_13, %c0_14] : memref<1x1xf32, #tpu.memory_space<smem>>
      memref.store %19, %arg4[%c0_13, %c0_14] : memref<1x1xf32, #tpu.memory_space<smem>>
    } else {
    }
    return
  }
  func.func @transform_0(%arg0: i32, %arg1: i32) -> (i32, i32) {
    %c1_i32 = arith.constant 1 : i32
    %0 = arith.muli %arg1, %c1_i32 : i32
    %1 = arith.addi %0, %arg0 : i32
    %c0_i32 = arith.constant 0 : i32
    %c0_i32_0 = arith.constant 0 : i32
    return %1, %c0_i32 : i32, i32
  }
  func.func @transform_1(%arg0: i32, %arg1: i32) -> (i32, i32) {
    %c1_i32 = arith.constant 1 : i32
    %0 = arith.muli %arg1, %c1_i32 : i32
    %1 = arith.addi %0, %arg0 : i32
    %c0_i32 = arith.constant 0 : i32
    %c0_i32_0 = arith.constant 0 : i32
    return %1, %c0_i32 : i32, i32
  }
  func.func @transform_2(%arg0: i32, %arg1: i32) -> (i32, i32) {
    %c0_i32 = arith.constant 0 : i32
    %c0_i32_0 = arith.constant 0 : i32
    return %arg0, %c0_i32 : i32, i32
  }
}

module attributes {stable_mosaic.version = 11 : i64} {
  func.func @_mse_sum_kernel(%arg0: i32, %arg1: i32, %arg2: memref<16x128xf32, #tpu.memory_space<vmem>>, %arg3: memref<16x128xf32, #tpu.memory_space<vmem>>, %arg4: memref<1x1xf32, #tpu.memory_space<smem>>, %arg5: memref<8x128xf32, #tpu.memory_space<vmem>>) attributes {dimension_semantics = [#tpu.dimension_semantics<parallel>, #tpu.dimension_semantics<arbitrary>], iteration_bounds = array<i64: 1, 1>, scalar_prefetch = 0 : i64, scratch_operands = 1 : i64, tpu.core_type = #tpu.core_type<tc>, window_params = [{transform_indices = @transform_0, window_bounds = array<i64: 16, 128>}, {transform_indices = @transform_1, window_bounds = array<i64: 16, 128>}, {transform_indices = @transform_2, window_bounds = array<i64: 1, 1>}]} {
    %c0_i32 = arith.constant 0 : i32
    %0 = arith.cmpi eq, %arg1, %c0_i32 : i32
    %1 = arith.extui %0 : i1 to i32
    %c0_i32_0 = arith.constant 0 : i32
    %2 = arith.cmpi ne, %1, %c0_i32_0 : i32
    scf.if %2 {
      %cst_10 = arith.constant 0.000000e+00 : f32
      %15 = vector.broadcast %cst_10 : f32 to vector<8x128xf32>
      %c0_11 = arith.constant 0 : index
      %c0_12 = arith.constant 0 : index
      %16 = vector.load %arg5[%c0_11, %c0_12] : memref<8x128xf32, #tpu.memory_space<vmem>>, vector<8x128xf32>
      tpu.vector_store %arg5[%c0_11, %c0_12], %15 {strides = array<i32>} : memref<8x128xf32, #tpu.memory_space<vmem>>, vector<8x128xf32>,
    } else {
    }
    %c0 = arith.constant 0 : index
    %c0_1 = arith.constant 0 : index
    %3 = vector.load %arg2[%c0, %c0_1] : memref<16x128xf32, #tpu.memory_space<vmem>>, vector<16x128xf32>
    %c0_2 = arith.constant 0 : index
    %c0_3 = arith.constant 0 : index
    %4 = vector.load %arg3[%c0_2, %c0_3] : memref<16x128xf32, #tpu.memory_space<vmem>>, vector<16x128xf32>
    %5 = arith.subf %3, %4 : vector<16x128xf32>
    %6 = arith.mulf %5, %5 : vector<16x128xf32>
    %c0_4 = arith.constant 0 : index
    %c0_5 = arith.constant 0 : index
    %7 = vector.load %arg5[%c0_4, %c0_5] : memref<8x128xf32, #tpu.memory_space<vmem>>, vector<8x128xf32>
    %8 = vector.shape_cast %6 : vector<16x128xf32> to vector<2x8x128xf32>
    %cst = arith.constant dense<0.000000e+00> : vector<8x128xf32>
    %9 = vector.multi_reduction <add>, %8, %cst [0] : vector<2x8x128xf32> to vector<8x128xf32>
    %10 = arith.addf %7, %9 : vector<8x128xf32>
    %c0_6 = arith.constant 0 : index
    %c0_7 = arith.constant 0 : index
    %11 = vector.load %arg5[%c0_6, %c0_7] : memref<8x128xf32, #tpu.memory_space<vmem>>, vector<8x128xf32>
    tpu.vector_store %arg5[%c0_6, %c0_7], %10 {strides = array<i32>} : memref<8x128xf32, #tpu.memory_space<vmem>>, vector<8x128xf32>,
    %c0_i32_8 = arith.constant 0 : i32
    %12 = arith.cmpi eq, %arg1, %c0_i32_8 : i32
    %13 = arith.extui %12 : i1 to i32
    %c0_i32_9 = arith.constant 0 : i32
    %14 = arith.cmpi ne, %13, %c0_i32_9 : i32
    scf.if %14 {
      %c0_10 = arith.constant 0 : index
      %c0_11 = arith.constant 0 : index
      %15 = vector.load %arg5[%c0_10, %c0_11] : memref<8x128xf32, #tpu.memory_space<vmem>>, vector<8x128xf32>
      %16 = vector.shape_cast %15 : vector<8x128xf32> to vector<1x8x128xf32>
      %cst_12 = arith.constant dense<0.000000e+00> : vector<1xf32>
      %17 = vector.multi_reduction <add>, %16, %cst_12 [1, 2] : vector<1x8x128xf32> to vector<1xf32>
      %18 = vector.shape_cast %17 : vector<1xf32> to vector<1x1x1xf32>
      %19 = vector.extract %18[0, 0, 0] : f32 from vector<1x1x1xf32>
      %c0_13 = arith.constant 0 : index
      %c0_14 = arith.constant 0 : index
      %20 = memref.load %arg4[%c0_13, %c0_14] : memref<1x1xf32, #tpu.memory_space<smem>>
      memref.store %19, %arg4[%c0_13, %c0_14] : memref<1x1xf32, #tpu.memory_space<smem>>
    } else {
    }
    return
  }
  func.func @transform_0(%arg0: i32, %arg1: i32) -> (i32, i32) {
    %c1_i32 = arith.constant 1 : i32
    %0 = arith.muli %arg1, %c1_i32 : i32
    %1 = arith.addi %0, %arg0 : i32
    %c0_i32 = arith.constant 0 : i32
    %c0_i32_0 = arith.constant 0 : i32
    return %1, %c0_i32 : i32, i32
  }
  func.func @transform_1(%arg0: i32, %arg1: i32) -> (i32, i32) {
    %c1_i32 = arith.constant 1 : i32
    %0 = arith.muli %arg1, %c1_i32 : i32
    %1 = arith.addi %0, %arg0 : i32
    %c0_i32 = arith.constant 0 : i32
    %c0_i32_0 = arith.constant 0 : i32
    return %1, %c0_i32 : i32, i32
  }
  func.func @transform_2(%arg0: i32, %arg1: i32) -> (i32, i32) {
    %c0_i32 = arith.constant 0 : i32
    %c0_i32_0 = arith.constant 0 : i32
    return %arg0, %c0_i32 : i32, i32
  }
}

</mosaic_0001>

<llo_original>
// kernel: tpu_custom_call.1
$region0: #{tpu_custom_call.1}
  #allocation0 [shape = 'u32[]', space=smem, size = 0x4, offset = 0x4, fixed_abs, tag = 'smem constant byte address 0x4 - core index']
  #allocation1 [shape = 'u32[144,128]{1,0:T(1,128)}', space=vmem, size = 0x12000, scoped, tag = 'internal scratch']
  #allocation2 [shape = 'f32[8,128]{1,0:T(8,128)}', space=vmem, size = 0x1000, scoped, tag = 'scratch operand']
  %s0 = inlined_call_operand.hbm [shape: f32[16,128], index: 0, kind: input, shape index: {}]
  %s1 = inlined_call_operand.hbm [shape: f32[16,128], index: 1, kind: input, shape index: {}]
  %s2 = inlined_call_operand.hbm [shape: f32[1,1], index: 2, kind: output, shape index: {}]
  %s3 = sld [smem:[#allocation0]]
  $region34: #{tpu_custom_call.1} parent=0
    _
  %s5 = ssub.s32 1, %s3
  %s6 = scalar_select 0, %s5, %s3
  $region1: #{tpu_custom_call.1} parent=0
    #allocation3 [shape = 'u8[8192]{0}', space=vmem, size = 0x2000, scoped, tag = 'input window, operand 0, single buffered']
    #allocation4 [shape = 's32[1]{0}', space=sflag, size = 0x4, scoped, tag = 'scoped memory for tpu_custom_call.1']
    #allocation5 [shape = 's32[1]{0}', space=sflag, size = 0x4, scoped, tag = 'scoped memory for tpu_custom_call.1']
    #allocation6 [shape = 'u8[8192]{0}', space=vmem, size = 0x2000, scoped, tag = 'input window, operand 1, single buffered']
    #allocation7 [shape = 's32[1]{0}', space=sflag, size = 0x4, scoped, tag = 'scoped memory for tpu_custom_call.1']
    #allocation8 [shape = 'u8[512]{0}', space=smem, size = 0x200, scoped, tag = 'output window, operand 0, single buffered']
    %7 = vsyncpa [#allocation4], 0
    %8 = vsyncpa [#allocation7], 0
    %9 = vsyncpa [#allocation5], 0
    // Predicated region
    $region2: #{tpu_custom_call.1} parent=1 // pred_check
      _
    $region3: #{tpu_custom_call.1} parent=1 // pred_check_branch
      %11 = sbr.rel (0) target = $region5
    $region4: #{tpu_custom_call.1} parent=1 // pred_region
      %s12 = sadd.s32 0, %s6
      %s13 = smul.u32 2, %s12
      %s15 = ssub.s32 256, 256
      %16 = vsyncadd [#allocation4], %s15
      %s17 = smul.addr %s13, 128
      %s18 = scalar_lea.hbm %s0, %s17
      %s19 = sshll.u32 [#allocation3], 4
      %s20 = int_to_ptr.vmem [resolvable:$true] %s19
      %25 = dma.hbm_to_vmem [thread:$0]  %s18, 256, %s20, [#allocation4], 128, 128, 8
    $region5: #{tpu_custom_call.1} parent=1 // pred_fallthru
      _
    // Predicated region
    $region6: #{tpu_custom_call.1} parent=1 // pred_check
      _
    $region7: #{tpu_custom_call.1} parent=1 // pred_check_branch
      %27 = sbr.rel (0) target = $region9
    $region8: #{tpu_custom_call.1} parent=1 // pred_region
      %s28 = sadd.s32 0, %s6
      %s29 = smul.u32 2, %s28
      %s31 = ssub.s32 256, 256
      %32 = vsyncadd [#allocation7], %s31
      %s33 = smul.addr %s29, 128
      %s34 = scalar_lea.hbm %s1, %s33
      %s35 = sshll.u32 [#allocation6], 4
      %s36 = int_to_ptr.vmem [resolvable:$true] %s35
      %41 = dma.hbm_to_vmem [thread:$0]  %s34, 256, %s36, [#allocation7], 128, 128, 8
    $region9: #{tpu_custom_call.1} parent=1 // pred_fallthru
      _
    // Predicated region
    $region10: #{tpu_custom_call.1} parent=1 // pred_check
      _
    $region11: #{tpu_custom_call.1} parent=1 // pred_check_branch
      %43 = sbr.rel (0) target = $region13
    $region12: #{tpu_custom_call.1} parent=1 // pred_region
      %44 = dma.done [#allocation4], 256
    $region13: #{tpu_custom_call.1} parent=1 // pred_fallthru
      _
    // Predicated region
    $region14: #{tpu_custom_call.1} parent=1 // pred_check
      _
    $region15: #{tpu_custom_call.1} parent=1 // pred_check_branch
      %46 = sbr.rel (0) target = $region17
    $region16: #{tpu_custom_call.1} parent=1 // pred_region
      %47 = dma.done [#allocation7], 256
    $region17: #{tpu_custom_call.1} parent=1 // pred_fallthru
      _
    %s48 = sadd.s32 0, %s6
    %s49 = smul.u32 2, %s48
    %s50 = sadd.s32 0, %s6
    %s51 = smul.u32 2, %s50
    %p52 = scmp.eq.s32.totalorder 0, 0
    // Predicated region
    $region18: #{tpu_custom_call.1} parent=1 // pred_check
      %p53 = pneg %p52
    $region19: #{tpu_custom_call.1} parent=1 // pred_check_branch
      %55 = sbr.rel (%p53) target = $region21
    $region20: #{tpu_custom_call.1} parent=1 // pred_region
      %56 = vst [vmem:[#allocation2] sm:$0xff] 0.0
    $region21: #{tpu_custom_call.1} parent=1 // pred_fallthru
      _
    %v57 = vld [vmem:[#allocation3] sm:$0xff]
    %v58 = vld [vmem:[#allocation3 + $0x8] sm:$0xff]
    %v59 = vld [vmem:[#allocation6] sm:$0xff]
    %v60 = vld [vmem:[#allocation6 + $0x8] sm:$0xff]
    %v61 = vsub.f32 %v57, %v59
    %v62 = vsub.f32 %v58, %v60
    %v63 = vmul.f32 %v61, %v61
    %v64 = vmul.f32 %v62, %v62
    %v65 = vld [vmem:[#allocation2] sm:$0xff]
    %v66 = vadd.f32 %v63, %v64
    %v67 = vadd.f32 %v65, %v66
    %68 = vst [vmem:[#allocation2] sm:$0xff] %v67
    // Predicated region
    $region22: #{tpu_custom_call.1} parent=1 // pred_check
      %p69 = pneg %p52
    $region23: #{tpu_custom_call.1} parent=1 // pred_check_branch
      %71 = sbr.rel (%p69) target = $region25
    $region24: #{tpu_custom_call.1} parent=1 // pred_region
      %v72 = vld [vmem:[#allocation2] sm:$0xff]
      %73 = vadd.xlane.f32.xlu0 %v72
      %v74 = vpop.xlane.xlu0 %73
      %v75 = vrot.slane %v74, 4
      %v76 = vadd.f32 %v74, %v75
      %v77 = vrot.slane %v76, 2
      %v78 = vadd.f32 %v76, %v77
      %v79 = vrot.slane %v78, 1
      %v80 = vadd.f32 %v78, %v79
      %s81 = vtos %v80
      %s82 = scalar_lea.smem [#allocation8], 0
      %83 = sst [smem:[%s82]] %s81
    $region25: #{tpu_custom_call.1} parent=1 // pred_fallthru
      _
    // Predicated region
    $region26: #{tpu_custom_call.1} parent=1 // pred_check
      _
    $region27: #{tpu_custom_call.1} parent=1 // pred_check_branch
      %85 = sbr.rel (0) target = $region29
    $region28: #{tpu_custom_call.1} parent=1 // pred_region
      %s87 = ssub.s32 16, 16
      %88 = vsyncadd [#allocation5], %s87
      %s89 = smul.addr %s6, 16
      %s90 = scalar_lea.hbm %s2, %s89
      %93 = dma.smem_to_hbm [#allocation8], 16, %s90, [#allocation5]
    $region29: #{tpu_custom_call.1} parent=1 // pred_fallthru
      _
    // Predicated region
    $region30: #{tpu_custom_call.1} parent=1 // pred_check
      _
    $region31: #{tpu_custom_call.1} parent=1 // pred_check_branch
      %95 = sbr.rel (0) target = $region33
    $region32: #{tpu_custom_call.1} parent=1 // pred_region
      %96 = dma.done [#allocation5], 16
    $region33: #{tpu_custom_call.1} parent=1 // pred_fallthru
      _
    %97 = sfence
    %98 = vsyncpa [#allocation4], 1
    %99 = vsyncpa [#allocation7], 1
    %100 = vsyncpa [#allocation5], 1

// kernel: tpu_custom_call.1
$region0: #{tpu_custom_call.1}
  #allocation0 [shape = 'u32[]', space=smem, size = 0x4, offset = 0x4, fixed_abs, tag = 'smem constant byte address 0x4 - core index']
  #allocation1 [shape = 'u32[144,128]{1,0:T(1,128)}', space=vmem, size = 0x12000, scoped, tag = 'internal scratch']
  #allocation2 [shape = 'f32[8,128]{1,0:T(8,128)}', space=vmem, size = 0x1000, scoped, tag = 'scratch operand']
  %s0 = inlined_call_operand.hbm [shape: f32[16,128], index: 0, kind: input, shape index: {}]
  %s1 = inlined_call_operand.hbm [shape: f32[16,128], index: 1, kind: input, shape index: {}]
  %s2 = inlined_call_operand.hbm [shape: f32[1,1], index: 2, kind: output, shape index: {}]
  %s3 = sld [smem:[#allocation0]]
  $region34: #{tpu_custom_call.1} parent=0
    _
  %s5 = ssub.s32 1, %s3
  %s6 = scalar_select 0, %s5, %s3
  $region1: #{tpu_custom_call.1} parent=0
    #allocation3 [shape = 'u8[8192]{0}', space=vmem, size = 0x2000, scoped, tag = 'input window, operand 0, single buffered']
    #allocation4 [shape = 's32[1]{0}', space=sflag, size = 0x4, scoped, tag = 'scoped memory for tpu_custom_call.1']
    #allocation5 [shape = 's32[1]{0}', space=sflag, size = 0x4, scoped, tag = 'scoped memory for tpu_custom_call.1']
    #allocation6 [shape = 'u8[8192]{0}', space=vmem, size = 0x2000, scoped, tag = 'input window, operand 1, single buffered']
    #allocation7 [shape = 's32[1]{0}', space=sflag, size = 0x4, scoped, tag = 'scoped memory for tpu_custom_call.1']
    #allocation8 [shape = 'u8[512]{0}', space=smem, size = 0x200, scoped, tag = 'output window, operand 0, single buffered']
    %7 = vsyncpa [#allocation4], 0
    %8 = vsyncpa [#allocation7], 0
    %9 = vsyncpa [#allocation5], 0
    // Predicated region
    $region2: #{tpu_custom_call.1} parent=1 // pred_check
      _
    $region3: #{tpu_custom_call.1} parent=1 // pred_check_branch
      %11 = sbr.rel (0) target = $region5
    $region4: #{tpu_custom_call.1} parent=1 // pred_region
      %s12 = sadd.s32 0, 0
      %s13 = smul.u32 2, %s12
      %s15 = ssub.s32 256, 256
      %16 = vsyncadd [#allocation4], %s15
      %s17 = smul.addr %s13, 128
      %s18 = scalar_lea.hbm %s0, %s17
      %s19 = sshll.u32 [#allocation3], 4
      %s20 = int_to_ptr.vmem [resolvable:$true] %s19
      %25 = dma.hbm_to_vmem [thread:$0]  %s18, 256, %s20, [#allocation4], 128, 128, 8
    $region5: #{tpu_custom_call.1} parent=1 // pred_fallthru
      _
    // Predicated region
    $region6: #{tpu_custom_call.1} parent=1 // pred_check
      _
    $region7: #{tpu_custom_call.1} parent=1 // pred_check_branch
      %27 = sbr.rel (0) target = $region9
    $region8: #{tpu_custom_call.1} parent=1 // pred_region
      %s28 = sadd.s32 0, 0
      %s29 = smul.u32 2, %s28
      %s31 = ssub.s32 256, 256
      %32 = vsyncadd [#allocation7], %s31
      %s33 = smul.addr %s29, 128
      %s34 = scalar_lea.hbm %s1, %s33
      %s35 = sshll.u32 [#allocation6], 4
      %s36 = int_to_ptr.vmem [resolvable:$true] %s35
      %41 = dma.hbm_to_vmem [thread:$0]  %s34, 256, %s36, [#allocation7], 128, 128, 8
    $region9: #{tpu_custom_call.1} parent=1 // pred_fallthru
      _
    // Predicated region
    $region10: #{tpu_custom_call.1} parent=1 // pred_check
      _
    $region11: #{tpu_custom_call.1} parent=1 // pred_check_branch
      %43 = sbr.rel (0) target = $region13
    $region12: #{tpu_custom_call.1} parent=1 // pred_region
      %44 = dma.done [#allocation4], 256
    $region13: #{tpu_custom_call.1} parent=1 // pred_fallthru
      _
    // Predicated region
    $region14: #{tpu_custom_call.1} parent=1 // pred_check
      _
    $region15: #{tpu_custom_call.1} parent=1 // pred_check_branch
      %46 = sbr.rel (0) target = $region17
    $region16: #{tpu_custom_call.1} parent=1 // pred_region
      %47 = dma.done [#allocation7], 256
    $region17: #{tpu_custom_call.1} parent=1 // pred_fallthru
      _
    %s48 = sadd.s32 0, 0
    %s49 = smul.u32 2, %s48
    %s50 = sadd.s32 0, 0
    %s51 = smul.u32 2, %s50
    %p52 = scmp.eq.s32.totalorder 0, 0
    // Predicated region
    $region18: #{tpu_custom_call.1} parent=1 // pred_check
      %p53 = pneg %p52
    $region19: #{tpu_custom_call.1} parent=1 // pred_check_branch
      %55 = sbr.rel (%p53) target = $region21
    $region20: #{tpu_custom_call.1} parent=1 // pred_region
      %56 = vst [vmem:[#allocation2] sm:$0xff] 0.0
    $region21: #{tpu_custom_call.1} parent=1 // pred_fallthru
      _
    %v57 = vld [vmem:[#allocation3] sm:$0xff]
    %v58 = vld [vmem:[#allocation3 + $0x8] sm:$0xff]
    %v59 = vld [vmem:[#allocation6] sm:$0xff]
    %v60 = vld [vmem:[#allocation6 + $0x8] sm:$0xff]
    %v61 = vsub.f32 %v57, %v59
    %v62 = vsub.f32 %v58, %v60
    %v63 = vmul.f32 %v61, %v61
    %v64 = vmul.f32 %v62, %v62
    %v65 = vld [vmem:[#allocation2] sm:$0xff]
    %v66 = vadd.f32 %v63, %v64
    %v67 = vadd.f32 %v65, %v66
    %68 = vst [vmem:[#allocation2] sm:$0xff] %v67
    // Predicated region
    $region22: #{tpu_custom_call.1} parent=1 // pred_check
      %p69 = pneg %p52
    $region23: #{tpu_custom_call.1} parent=1 // pred_check_branch
      %71 = sbr.rel (%p69) target = $region25
    $region24: #{tpu_custom_call.1} parent=1 // pred_region
      %v72 = vld [vmem:[#allocation2] sm:$0xff]
      %73 = vadd.xlane.f32.xlu0 %v72
      %v74 = vpop.xlane.xlu0 %73
      %v75 = vrot.slane %v74, 4
      %v76 = vadd.f32 %v74, %v75
      %v77 = vrot.slane %v76, 2
      %v78 = vadd.f32 %v76, %v77
      %v79 = vrot.slane %v78, 1
      %v80 = vadd.f32 %v78, %v79
      %s81 = vtos %v80
      %s82 = scalar_lea.smem [#allocation8], 0
      %83 = sst [smem:[%s82]] %s81
    $region25: #{tpu_custom_call.1} parent=1 // pred_fallthru
      _
    // Predicated region
    $region26: #{tpu_custom_call.1} parent=1 // pred_check
      _
    $region27: #{tpu_custom_call.1} parent=1 // pred_check_branch
      %85 = sbr.rel (0) target = $region29
    $region28: #{tpu_custom_call.1} parent=1 // pred_region
      %s87 = ssub.s32 16, 16
      %88 = vsyncadd [#allocation5], %s87
      %91 = dma.smem_to_hbm [#allocation8], 16, %s2, [#allocation5]
    $region29: #{tpu_custom_call.1} parent=1 // pred_fallthru
      _
    // Predicated region
    $region30: #{tpu_custom_call.1} parent=1 // pred_check
      _
    $region31: #{tpu_custom_call.1} parent=1 // pred_check_branch
      %93 = sbr.rel (0) target = $region33
    $region32: #{tpu_custom_call.1} parent=1 // pred_region
      %94 = dma.done [#allocation5], 16
    $region33: #{tpu_custom_call.1} parent=1 // pred_fallthru
      _
    %95 = sfence
    %96 = vsyncpa [#allocation4], 1
    %97 = vsyncpa [#allocation7], 1
    %98 = vsyncpa [#allocation5], 1

</llo_original>
